<compile_context>
chip_gen: v5e
topology: v5e:2x2
jax: 0.10.0
libtpu: 0.0.40
codegen_flags: <defaults>
</compile_context>

<pallas_src>
import functools

import jax
import jax.numpy as jnp
from jax import lax
from jax.experimental import pallas as pl
from jax.experimental.pallas import tpu as pltpu


# --------------------------- hardware / budgets ------------------------------

def _vmem_limit_bytes():
    """Per-call VMEM limit derived from this generation's physical capacity
    (v5e/v6e: 128 MiB -> ~90 MiB, v7x: 64 MiB -> ~45 MiB)."""
    cap = 64 * 1024 * 1024                      # conservative default
    try:
        info = pltpu.get_tpu_info()
        cap = int(getattr(info, "vmem_capacity_bytes", cap))
    except Exception:
        pass
    return min(int(cap * 0.7), 100 * 1024 * 1024)


_STREAM_BLOCK_BYTES = 2 * 1024 * 1024           # target x-block per grid step
_L_TILES = (8192, 4096, 2048, 1024, 512, 256, 128)


def _pick_l_tile(l):
    for t in _L_TILES:
        if l % t == 0:
            return t
    return l                                    # not a multiple of 128: whole dim


def _pick_c_tile(c, max_bytes, row_bytes):
    """Largest multiple-of-8 divisor of C that (a) leaves >=2 C-blocks when
    C >= 16 (so v7x can shard the 'parallel' C axis over both TensorCores)
    and (b) keeps tc * row_bytes under max_bytes."""
    if c % 8 != 0:
        return c                                # whole-dim block is always legal
    cap = c if c < 16 else c // 2
    cap = min(cap, max(8, max_bytes // max(row_bytes, 1)))
    best, t = 8, 8
    while t <= cap:
        if c % t == 0:
            best = t
        t += 8
    return best


def _pick_n_tile(n, max_bytes, slab_bytes):
    """Largest divisor of N such that the (TN, tc, tl) block stays ~max_bytes."""
    max_tn = max(1, max_bytes // max(slab_bytes, 1))
    best = 1
    for t in range(1, min(n, max_tn) + 1):
        if n % t == 0:
            best = t
    return best


# --------------------------- fused (VMEM-resident) ---------------------------

def _vbn_fused_kernel(x_ref, par_ref, o_ref, mean_ref, meansq_ref, *,
                      inv_denom, eps, has_ref, new_coeff):
    """Single-read VBN: stats + blend + normalize on a resident (N, tc, L) slab.

    x_ref:   (N, TC, L)
    par_ref: (4, TC, 1)  rows = gamma, beta, ref_mean, ref_mean_sq
    o_ref:   (N, TC, L)
    mean_ref / meansq_ref: (TC, 1)
    """
    n = x_ref.shape[0]

    sum_x = None
    sum_sq = None
    for b in range(n):                                    # batch fold (VPU adds)
        xb = x_ref[b].astype(jnp.float32)                 # (TC, L)
        if b == 0:
            sum_x = xb
            sum_sq = xb * xb
        else:
            sum_x = sum_x + xb
            sum_sq = sum_sq + xb * xb

    mean = jnp.sum(sum_x, axis=-1, keepdims=True) * inv_denom      # (TC, 1)
    mean_sq = jnp.sum(sum_sq, axis=-1, keepdims=True) * inv_denom  # (TC, 1)

    if has_ref:
        old_coeff = 1.0 - new_coeff
        mean = new_coeff * mean + old_coeff * par_ref[2]
        mean_sq = new_coeff * mean_sq + old_coeff * par_ref[3]

    gamma = par_ref[0]                                    # (TC, 1)
    beta = par_ref[1]
    inv_std = lax.rsqrt(eps + mean_sq - mean * mean)
    scale = gamma * inv_std                               # (TC, 1)
    shift = beta - mean * scale                           # (TC, 1)

    for b in range(n):                                    # normalize from VMEM
        xb = x_ref[b].astype(jnp.float32)
        o_ref[b] = (xb * scale + shift).astype(o_ref.dtype)

    mean_ref[...] = mean
    meansq_ref[...] = mean_sq


def _vbn_fused(x, params, tc, *, inv_denom, eps, has_ref, new_coeff, vmem_limit):
    n, c, l = x.shape
    kernel = functools.partial(_vbn_fused_kernel, inv_denom=inv_denom, eps=eps,
                               has_ref=has_ref, new_coeff=new_coeff)
    return pl.pallas_call(
        kernel,
        out_shape=(
            jax.ShapeDtypeStruct((n, c, l), x.dtype),
            jax.ShapeDtypeStruct((c, 1), jnp.float32),
            jax.ShapeDtypeStruct((c, 1), jnp.float32),
        ),
        grid_spec=pltpu.PrefetchScalarGridSpec(
            num_scalar_prefetch=0,
            grid=(c // tc,),
            in_specs=[
                pl.BlockSpec((n, tc, l), lambda ci: (0, ci, 0)),
                pl.BlockSpec((4, tc, 1), lambda ci: (0, ci, 0)),
            ],
            out_specs=(
                pl.BlockSpec((n, tc, l), lambda ci: (0, ci, 0)),
                pl.BlockSpec((tc, 1), lambda ci: (ci, 0)),
                pl.BlockSpec((tc, 1), lambda ci: (ci, 0)),
            ),
        ),
        compiler_params=pltpu.CompilerParams(
            dimension_semantics=("parallel",),
            vmem_limit_bytes=vmem_limit,
        ),
    )(x, params)


# --------------------------- two-pass streaming -------------------------------

def _stats_kernel(x_ref, mean_ref, meansq_ref, sumx_ref, sumsq_ref, *, inv_denom):
    """Accumulate partial sums of x and x*x per channel tile; finalize in-kernel.

    grid = (C_tiles, N_tiles, L_tiles); (N, L) are the reduction axes (last).
    x_ref:     (TN, TC, TL)  current block
    mean_ref:  (TC, 1)       written only on the last reduction step
    sumx_ref / sumsq_ref: (TC, W) resident VMEM accumulators (W = 128 or TL)
    """
    ni, li = pl.program_id(1), pl.program_id(2)

    @pl.when(jnp.logical_and(ni == 0, li == 0))
    def _():
        sumx_ref[...] = jnp.zeros_like(sumx_ref)
        sumsq_ref[...] = jnp.zeros_like(sumsq_ref)

    tn = x_ref.shape[0]
    w = sumx_ref.shape[-1]
    sx = sumx_ref[...]
    sq = sumsq_ref[...]
    for b in range(tn):                                   # batch fold
        xb = x_ref[b].astype(jnp.float32)                 # (TC, TL)
        tl = xb.shape[-1]
        for i in range(tl // w):                          # 128-wide lane fold
            chunk = xb[:, i * w:(i + 1) * w]
            sx = sx + chunk
            sq = sq + chunk * chunk
    sumx_ref[...] = sx
    sumsq_ref[...] = sq

    @pl.when(jnp.logical_and(ni == pl.num_programs(1) - 1,
                             li == pl.num_programs(2) - 1))
    def _():
        # Final cross-lane reduce + divide once per channel tile (free XLU slot).
        mean_ref[...] = jnp.sum(sx, axis=-1, keepdims=True) * inv_denom
        meansq_ref[...] = jnp.sum(sq, axis=-1, keepdims=True) * inv_denom


def _stats_pass(x, tn, tc, tl, *, inv_denom, vmem_limit):
    n, c, l = x.shape
    w = 128 if tl % 128 == 0 else tl
    kernel = functools.partial(_stats_kernel, inv_denom=inv_denom)
    return pl.pallas_call(
        kernel,
        out_shape=(
            jax.ShapeDtypeStruct((c, 1), jnp.float32),
            jax.ShapeDtypeStruct((c, 1), jnp.float32),
        ),
        grid_spec=pltpu.PrefetchScalarGridSpec(
            num_scalar_prefetch=0,
            grid=(c // tc, n // tn, l // tl),
            in_specs=[
                pl.BlockSpec((tn, tc, tl), lambda ci, ni, li: (ni, ci, li)),
            ],
            out_specs=(
                pl.BlockSpec((tc, 1), lambda ci, ni, li: (ci, 0)),
                pl.BlockSpec((tc, 1), lambda ci, ni, li: (ci, 0)),
            ),
            scratch_shapes=[
                pltpu.VMEM((tc, w), jnp.float32),
                pltpu.VMEM((tc, w), jnp.float32),
            ],
        ),
        compiler_params=pltpu.CompilerParams(
            dimension_semantics=("parallel", "arbitrary", "arbitrary"),
            vmem_limit_bytes=vmem_limit,
        ),
    )(x)


def _normalize_kernel(x_ref, ss_ref, o_ref):
    """out = x * scale + shift (per-channel scale/shift broadcast over lanes).

    x_ref: (TN, TC, TL); ss_ref: (2, TC, 1) rows = scale, shift.
    """
    scale = ss_ref[0]                                     # (TC, 1)
    shift = ss_ref[1]
    tn = x_ref.shape[0]
    for b in range(tn):
        xb = x_ref[b].astype(jnp.float32)                 # (TC, TL)
        o_ref[b] = (xb * scale + shift).astype(o_ref.dtype)


def _normalize_pass(x, scale_shift, tn, tc, tl, *, vmem_limit):
    n, c, l = x.shape
    return pl.pallas_call(
        _normalize_kernel,
        out_shape=jax.ShapeDtypeStruct(x.shape, x.dtype),
        grid_spec=pltpu.PrefetchScalarGridSpec(
            num_scalar_prefetch=0,
            grid=(n // tn, c // tc, l // tl),
            in_specs=[
                pl.BlockSpec((tn, tc, tl), lambda ni, ci, li: (ni, ci, li)),
                pl.BlockSpec((2, tc, 1), lambda ni, ci, li: (0, ci, 0)),
            ],
            out_specs=pl.BlockSpec((tn, tc, tl), lambda ni, ci, li: (ni, ci, li)),
        ),
        compiler_params=pltpu.CompilerParams(
            dimension_semantics=("parallel", "parallel", "parallel"),
            vmem_limit_bytes=vmem_limit,
        ),
    )(x, scale_shift)


# ------------------------------ public op ------------------------------------

def virtual_batch_norm_1d(x, gamma, beta, ref_mean=None, ref_mean_sq=None,
                          eps=1e-5, allow_fused=True):
    """Mirror of VirtualBatchNorm1d.forward: returns (out, mean, mean_sq)."""
    assert x.ndim == 3
    n, c, l = x.shape
    dtype_bytes = jnp.dtype(x.dtype).itemsize
    vmem_limit = _vmem_limit_bytes()
    has_ref = ref_mean is not None and ref_mean_sq is not None
    inv_denom = 1.0 / float(n * l)
    new_coeff = 1.0 / (n + 1.0)

    gamma_c = gamma.reshape(c, 1).astype(jnp.float32)
    beta_c = beta.reshape(c, 1).astype(jnp.float32)

    # ---- fused single-read path: whole (N, tc, L) channel slab fits in VMEM.
    fused_block_budget = vmem_limit // 6        # in/out double-buffers + temps
    tc_fused = _pick_c_tile(c, fused_block_budget, n * l * dtype_bytes)
    fused_ok = allow_fused and (tc_fused * n * l * dtype_bytes <= fused_block_budget)

    if fused_ok:
        if has_ref:
            ref_m = ref_mean.reshape(c, 1).astype(jnp.float32)
            ref_ms = ref_mean_sq.reshape(c, 1).astype(jnp.float32)
        else:
            ref_m = jnp.zeros((c, 1), jnp.float32)
            ref_ms = jnp.zeros((c, 1), jnp.float32)
        params = jnp.stack([gamma_c, beta_c, ref_m, ref_ms], axis=0)   # (4, C, 1)
        out, mean, mean_sq = _vbn_fused(
            x, params, tc_fused, inv_denom=inv_denom, eps=float(eps),
            has_ref=has_ref, new_coeff=new_coeff, vmem_limit=vmem_limit)
        return out, mean.reshape(1, c, 1), mean_sq.reshape(1, c, 1)

    # ---- two-pass streaming fallback (activation too large to keep resident).
    tl = _pick_l_tile(l)
    tc = _pick_c_tile(c, _STREAM_BLOCK_BYTES, tl * dtype_bytes)
    tn = _pick_n_tile(n, _STREAM_BLOCK_BYTES, tc * tl * dtype_bytes)

    mean, mean_sq = _stats_pass(x, tn, tc, tl, inv_denom=inv_denom,
                                vmem_limit=vmem_limit)                 # (C, 1)

    if has_ref:
        old_coeff = 1.0 - new_coeff
        mean = new_coeff * mean + old_coeff * ref_mean.reshape(c, 1).astype(jnp.float32)
        mean_sq = new_coeff * mean_sq + old_coeff * ref_mean_sq.reshape(c, 1).astype(jnp.float32)

    # Fold gamma/beta/mean/inv_std into one per-channel scale & shift so the
    # hot streaming pass is a single multiply-add (no divide / sqrt).
    inv_std = lax.rsqrt(eps + mean_sq - mean * mean)                   # (C, 1)
    scale = gamma_c * inv_std
    shift = beta_c - mean * scale
    scale_shift = jnp.stack([scale, shift], axis=0)                    # (2, C, 1)

    out = _normalize_pass(x, scale_shift, tn, tc, tl, vmem_limit=vmem_limit)
    return out, mean.reshape(1, c, 1), mean_sq.reshape(1, c, 1)


# ------------------------------ self test ------------------------------------

def _ref_forward(x, gamma, beta, ref_m, ref_ms, eps):
    m = jnp.mean(x, axis=2, keepdims=True).mean(axis=0, keepdims=True)
    ms = jnp.mean(x * x, axis=2, keepdims=True).mean(axis=0, keepdims=True)
    if ref_m is not None:
        nc = 1.0 / (x.shape[0] + 1.0)
        m = nc * m + (1.0 - nc) * ref_m
        ms = nc * ms + (1.0 - nc) * ref_ms
    std = jnp.sqrt(eps + ms - m * m)
    return (x - m) / std * gamma + beta, m, ms


if __name__ == "__main__":
    eps = 1e-5
    key = jax.random.PRNGKey(0)

    # (N, C, L, allow_fused): exercise the fused path (multi C-block and
    # whole-dim fallback) and the two-pass streaming path (multi-step
    # reduction with TN>1, and whole-dim fallback).
    configs = [
        (2, 32, 256, True),     # fused, 2 C-blocks
        (2, 32, 640, False),    # two-pass, TN=2, 5 L-tiles of 128
        (3, 4, 16, True),       # awkward dims -> whole-dim blocks, fused
        (2, 4, 16, False),      # awkward dims -> whole-dim blocks, two-pass
    ]
    for (N, C, L, fused) in configs:
        key, kg, kr, kx = jax.random.split(key, 4)

        # Parameters matching VirtualBatchNorm1d.__init__:
        # gamma ~ Normal(mean=1, std=0.02), beta = 0, both (1, C, 1).
        gamma = (1.0 + 0.02 * jax.random.normal(kg, (1, C, 1))).astype(jnp.float32)
        beta = jnp.zeros((1, C, 1), dtype=jnp.float32)

        x_ref_batch = jax.random.normal(kr, (N, C, L), dtype=jnp.float32)
        x = jax.random.normal(kx, (N, C, L), dtype=jnp.float32)

        # Reference-batch pass (no ref stats), then train-batch pass.
        out_r, m0, ms0 = virtual_batch_norm_1d(
            x_ref_batch, gamma, beta, None, None, eps, allow_fused=fused)
        out_t, m1, ms1 = virtual_batch_norm_1d(
            x, gamma, beta, m0, ms0, eps, allow_fused=fused)
        jax.block_until_ready((out_r, m0, ms0, out_t, m1, ms1))

        # Pure-JAX reference check.
        e_r, em0, ems0 = _ref_forward(x_ref_batch, gamma, beta, None, None, eps)
        e_t, em1, ems1 = _ref_forward(x, gamma, beta, em0, ems0, eps)

        assert jnp.allclose(out_r, e_r, atol=2e-5, rtol=2e-5), (N, C, L, fused)
        assert jnp.allclose(m0, em0, atol=1e-5, rtol=1e-5), (N, C, L, fused)
        assert jnp.allclose(ms0, ems0, atol=1e-5, rtol=1e-5), (N, C, L, fused)
        assert jnp.allclose(out_t, e_t, atol=2e-5, rtol=2e-5), (N, C, L, fused)
        assert jnp.allclose(m1, em1, atol=1e-5, rtol=1e-5), (N, C, L, fused)
        assert jnp.allclose(ms1, ems1, atol=1e-5, rtol=1e-5), (N, C, L, fused)

    print("KERNEL_OK")
</pallas_src>

<mosaic_0001>
module attributes {stable_mosaic.version = 11 : i64} {
  func.func @_vbn_fused_kernel(%arg0: i32, %arg1: memref<2x16x256xf32, #tpu.memory_space<vmem>>, %arg2: memref<4x16x1xf32, #tpu.memory_space<vmem>>, %arg3: memref<2x16x256xf32, #tpu.memory_space<vmem>>, %arg4: memref<16x1xf32, #tpu.memory_space<vmem>>, %arg5: memref<16x1xf32, #tpu.memory_space<vmem>>) attributes {dimension_semantics = [#tpu.dimension_semantics<parallel>], iteration_bounds = array<i64: 2>, scalar_prefetch = 0 : i64, scratch_operands = 0 : i64, tpu.core_type = #tpu.core_type<tc>, window_params = [{transform_indices = @transform_0, window_bounds = array<i64: 2, 16, 256>}, {transform_indices = @transform_1, window_bounds = array<i64: 4, 16, 1>}, {transform_indices = @transform_2, window_bounds = array<i64: 2, 16, 256>}, {transform_indices = @transform_3, window_bounds = array<i64: 16, 1>}, {transform_indices = @transform_4, window_bounds = array<i64: 16, 1>}]} {
    %c0 = arith.constant 0 : index
    %c0_0 = arith.constant 0 : index
    %c0_1 = arith.constant 0 : index
    %0 = vector.load %arg1[%c0, %c0_0, %c0_1] : memref<2x16x256xf32, #tpu.memory_space<vmem>>, vector<1x16x256xf32>
    %1 = vector.shape_cast %0 : vector<1x16x256xf32> to vector<16x256xf32>
    %2 = arith.mulf %1, %1 : vector<16x256xf32>
    %c1 = arith.constant 1 : index
    %c0_2 = arith.constant 0 : index
    %c0_3 = arith.constant 0 : index
    %3 = vector.load %arg1[%c1, %c0_2, %c0_3] : memref<2x16x256xf32, #tpu.memory_space<vmem>>, vector<1x16x256xf32>
    %4 = vector.shape_cast %3 : vector<1x16x256xf32> to vector<16x256xf32>
    %5 = arith.addf %1, %4 : vector<16x256xf32>
    %6 = arith.mulf %4, %4 : vector<16x256xf32>
    %7 = arith.addf %2, %6 : vector<16x256xf32>
    %cst = arith.constant dense<0.000000e+00> : vector<16xf32>
    %8 = vector.multi_reduction <add>, %5, %cst [1] : vector<16x256xf32> to vector<16xf32>
    %9 = vector.shape_cast %8 : vector<16xf32> to vector<16x1xf32>
    %cst_4 = arith.constant 0.001953125 : f32
    %10 = vector.broadcast %cst_4 : f32 to vector<16x1xf32>
    %11 = arith.mulf %9, %10 : vector<16x1xf32>
    %cst_5 = arith.constant dense<0.000000e+00> : vector<16xf32>
    %12 = vector.multi_reduction <add>, %7, %cst_5 [1] : vector<16x256xf32> to vector<16xf32>
    %13 = vector.shape_cast %12 : vector<16xf32> to vector<16x1xf32>
    %cst_6 = arith.constant 0.001953125 : f32
    %14 = vector.broadcast %cst_6 : f32 to vector<16x1xf32>
    %15 = arith.mulf %13, %14 : vector<16x1xf32>
    %c0_7 = arith.constant 0 : index
    %c0_8 = arith.constant 0 : index
    %c0_9 = arith.constant 0 : index
    %16 = vector.load %arg2[%c0_7, %c0_8, %c0_9] : memref<4x16x1xf32, #tpu.memory_space<vmem>>, vector<1x16x1xf32>
    %17 = vector.shape_cast %16 : vector<1x16x1xf32> to vector<16x1xf32>
    %c1_10 = arith.constant 1 : index
    %c0_11 = arith.constant 0 : index
    %c0_12 = arith.constant 0 : index
    %18 = vector.load %arg2[%c1_10, %c0_11, %c0_12] : memref<4x16x1xf32, #tpu.memory_space<vmem>>, vector<1x16x1xf32>
    %19 = vector.shape_cast %18 : vector<1x16x1xf32> to vector<16x1xf32>
    %cst_13 = arith.constant 9.99999974E-6 : f32
    %20 = vector.broadcast %cst_13 : f32 to vector<16x1xf32>
    %21 = arith.addf %20, %15 : vector<16x1xf32>
    %22 = arith.mulf %11, %11 : vector<16x1xf32>
    %23 = arith.subf %21, %22 : vector<16x1xf32>
    %24 = math.rsqrt %23 : vector<16x1xf32>
    %25 = arith.mulf %17, %24 : vector<16x1xf32>
    %26 = arith.mulf %11, %25 : vector<16x1xf32>
    %27 = arith.subf %19, %26 : vector<16x1xf32>
    %c0_14 = arith.constant 0 : index
    %c0_15 = arith.constant 0 : index
    %c0_16 = arith.constant 0 : index
    %28 = vector.load %arg1[%c0_14, %c0_15, %c0_16] : memref<2x16x256xf32, #tpu.memory_space<vmem>>, vector<1x16x256xf32>
    %29 = vector.shape_cast %28 : vector<1x16x256xf32> to vector<16x256xf32>
    %30 = vector.broadcast %25 : vector<16x1xf32> to vector<16x256xf32>
    %31 = arith.mulf %29, %30 : vector<16x256xf32>
    %32 = vector.broadcast %27 : vector<16x1xf32> to vector<16x256xf32>
    %33 = arith.addf %31, %32 : vector<16x256xf32>
    %c0_17 = arith.constant 0 : index
    %c0_18 = arith.constant 0 : index
    %c0_19 = arith.constant 0 : index
    %34 = vector.load %arg3[%c0_17, %c0_18, %c0_19] : memref<2x16x256xf32, #tpu.memory_space<vmem>>, vector<1x16x256xf32>
    %35 = vector.shape_cast %34 : vector<1x16x256xf32> to vector<16x256xf32>
    %36 = vector.shape_cast %33 : vector<16x256xf32> to vector<1x16x256xf32>
    tpu.vector_store %arg3[%c0_17, %c0_18, %c0_19], %36 {strides = array<i32>} : memref<2x16x256xf32, #tpu.memory_space<vmem>>, vector<1x16x256xf32>,
    %c1_20 = arith.constant 1 : index
    %c0_21 = arith.constant 0 : index
    %c0_22 = arith.constant 0 : index
    %37 = vector.load %arg1[%c1_20, %c0_21, %c0_22] : memref<2x16x256xf32, #tpu.memory_space<vmem>>, vector<1x16x256xf32>
    %38 = vector.shape_cast %37 : vector<1x16x256xf32> to vector<16x256xf32>
    %39 = vector.broadcast %25 : vector<16x1xf32> to vector<16x256xf32>
    %40 = arith.mulf %38, %39 : vector<16x256xf32>
    %41 = vector.broadcast %27 : vector<16x1xf32> to vector<16x256xf32>
    %42 = arith.addf %40, %41 : vector<16x256xf32>
    %c1_23 = arith.constant 1 : index
    %c0_24 = arith.constant 0 : index
    %c0_25 = arith.constant 0 : index
    %43 = vector.load %arg3[%c1_23, %c0_24, %c0_25] : memref<2x16x256xf32, #tpu.memory_space<vmem>>, vector<1x16x256xf32>
    %44 = vector.shape_cast %43 : vector<1x16x256xf32> to vector<16x256xf32>
    %45 = vector.shape_cast %42 : vector<16x256xf32> to vector<1x16x256xf32>
    tpu.vector_store %arg3[%c1_23, %c0_24, %c0_25], %45 {strides = array<i32>} : memref<2x16x256xf32, #tpu.memory_space<vmem>>, vector<1x16x256xf32>,
    %c0_26 = arith.constant 0 : index
    %c0_27 = arith.constant 0 : index
    %46 = vector.load %arg4[%c0_26, %c0_27] : memref<16x1xf32, #tpu.memory_space<vmem>>, vector<16x1xf32>
    tpu.vector_store %arg4[%c0_26, %c0_27], %11 {strides = array<i32>} : memref<16x1xf32, #tpu.memory_space<vmem>>, vector<16x1xf32>,
    %c0_28 = arith.constant 0 : index
    %c0_29 = arith.constant 0 : index
    %47 = vector.load %arg5[%c0_28, %c0_29] : memref<16x1xf32, #tpu.memory_space<vmem>>, vector<16x1xf32>
    tpu.vector_store %arg5[%c0_28, %c0_29], %15 {strides = array<i32>} : memref<16x1xf32, #tpu.memory_space<vmem>>, vector<16x1xf32>,
    return
  }
  func.func @transform_0(%arg0: i32) -> (i32, i32, i32) {
    %c0_i32 = arith.constant 0 : i32
    %c0_i32_0 = arith.constant 0 : i32
    %c0_i32_1 = arith.constant 0 : i32
    return %c0_i32, %arg0, %c0_i32_0 : i32, i32, i32
  }
  func.func @transform_1(%arg0: i32) -> (i32, i32, i32) {
    %c0_i32 = arith.constant 0 : i32
    %c0_i32_0 = arith.constant 0 : i32
    %c0_i32_1 = arith.constant 0 : i32
    return %c0_i32, %arg0, %c0_i32_0 : i32, i32, i32
  }
  func.func @transform_2(%arg0: i32) -> (i32, i32, i32) {
    %c0_i32 = arith.constant 0 : i32
    %c0_i32_0 = arith.constant 0 : i32
    %c0_i32_1 = arith.constant 0 : i32
    return %c0_i32, %arg0, %c0_i32_0 : i32, i32, i32
  }
  func.func @transform_3(%arg0: i32) -> (i32, i32) {
    %c0_i32 = arith.constant 0 : i32
    %c0_i32_0 = arith.constant 0 : i32
    return %arg0, %c0_i32 : i32, i32
  }
  func.func @transform_4(%arg0: i32) -> (i32, i32) {
    %c0_i32 = arith.constant 0 : i32
    %c0_i32_0 = arith.constant 0 : i32
    return %arg0, %c0_i32 : i32, i32
  }
}

</mosaic_0001>

<llo_original>
// kernel: tpu_custom_call.1
$region0: #{tpu_custom_call.1}
  #allocation0 [shape = 'u32[]', space=smem, size = 0x4, offset = 0x4, fixed_abs, tag = 'smem constant byte address 0x4 - core index']
  #allocation1 [shape = 'u32[72,128]{1,0:T(1,128)}', space=vmem, size = 0x9000, scoped, tag = 'internal scratch']
  #allocation6 [shape = 's32[]', space=sflag, size = 0x4, offset = 0, fixed_abs, tag = 'sflag constant byte address 0x0 - dummy sync flag']
  %s0 = inlined_call_operand.vmem [shape: f32[2,32,256], index: 0, kind: input, shape index: {}]
  %s1 = inlined_call_operand.vmem [shape: f32[4,32,1], index: 1, kind: input, shape index: {}]
  %s2 = inlined_call_operand.hbm [shape: f32[2,32,256], index: 2, kind: output, shape index: {0}]
  %s3 = inlined_call_operand.vmem [shape: f32[32,1], index: 3, kind: output, shape index: {1}]
  %s4 = inlined_call_operand.vmem [shape: f32[32,1], index: 4, kind: output, shape index: {2}]
  %5 = xla_tuple %s2, %s3, %s4
  %s6 = sld [smem:[#allocation0]]
  $region118: #{tpu_custom_call.1} parent=0
    _
  %s8 = ssub.s32 1, %s6
  %s9 = scalar_select 0, %s8, %s6
  $region1: #{tpu_custom_call.1} parent=0
    #allocation2 [shape = 'u8[65536]{0}', space=vmem, size = 0x10000, scoped, tag = 'input window, operand 0']
    #allocation3 [shape = 'u8[65536]{0}', space=vmem, size = 0x10000, scoped, tag = 'input window, operand 1']
    #allocation4 [shape = 'u8[65536]{0}', space=vmem, size = 0x10000, scoped, tag = 'output window, operand 0']
    #allocation5 [shape = 's32[2]{0}', space=sflag, size = 0x8, scoped, tag = 'scoped memory for tpu_custom_call.1']
    %10 = vsyncpa [#allocation5], 0
    %s11 = scalar_lea.sflag [#allocation5], 1
    %12 = vsyncpa %s11, 0
    loop: start=0, step=1, limit=4
    $region2: #{tpu_custom_call.1} parent=1 // loop_pre_header
      _
    $region3: #{tpu_custom_call.1} parent=1 // loop_header
      %s14 = sphi 0, %s18
      %p15 = scmp.ge.s32.totalorder %s14, 4
      %s24 = sphi 0, %s26
      %s27 = sphi 0, %s24
      %s28 = sphi 0, %s27
      %s44 = sphi 0, %s28
      %s50 = sphi 0, %s52
      %s53 = sphi 0, %s50
      %s54 = sphi 0, %s53
      %s70 = sphi 0, %s54
      %s76 = sphi 0, %s78
      %s79 = sphi 0, %s76
      %s80 = sphi 0, %s79
      %s96 = sphi 0, %s80
      %s102 = sphi 0, %s104
      %s105 = sphi 0, %s102
      %s106 = sphi 0, %s105
      %s122 = sphi 0, %s106
      %s128 = sphi 0, %s130
      %s131 = sphi 0, %s128
      %s132 = sphi 0, %s131
      %s148 = sphi 0, %s132
    $region4: #{tpu_custom_call.1} parent=1 // loop_header_branch
      %17 = sbr.rel (%p15) target = $region8
    $region5: #{tpu_custom_call.1} parent=1 // loop_body
      %s19 = ssub.s32 %s14, 1
      %s20 = ssub.s32 %s14, 2
      %s21 = sadd.s32 %s14, 1
      %s22 = ssub.s32 %s14, %s21
      %p23 = scmp.eq.s32.totalorder %s22, 0
      %s25 = sadd.s32 %s24, 1
      %s26 = scalar_select %p23, %s24, %s25
      %p29 = pneg %p23
      %p30 = scmp.eq.s32.totalorder %s14, 1
      %p31 = por %p29, %p30
      %p32 = scmp.ne.s32.totalorder %s24, %s27
      %p33 = scmp.eq.s32.totalorder %s14, 0
      %p34 = por %p32, %p33
      %p35 = scmp.ne.s32.totalorder %s24, %s27
      %p36 = scmp.eq.s32.totalorder %s19, 1
      %p37 = por %p35, %p36
      %p38 = scmp.ne.s32.totalorder %s27, %s28
      %p39 = scmp.eq.s32.totalorder %s19, 0
      %p40 = por %p38, %p39
      %p41 = scmp.ne.s32.totalorder %s27, %s28
      %p42 = scmp.eq.s32.totalorder %s20, 1
      %p43 = por %p41, %p42
      %p45 = scmp.ne.s32.totalorder %s28, %s44
      %p46 = scmp.eq.s32.totalorder %s20, 0
      %p47 = por %p45, %p46
      %s48 = ssub.s32 %s14, %s21
      %p49 = scmp.eq.s32.totalorder %s48, 0
      %s51 = sadd.s32 %s50, 1
      %s52 = scalar_select %p49, %s50, %s51
      %p55 = pneg %p49
      %p56 = scmp.eq.s32.totalorder %s14, 1
      %p57 = por %p55, %p56
      %p58 = scmp.ne.s32.totalorder %s50, %s53
      %p59 = scmp.eq.s32.totalorder %s14, 0
      %p60 = por %p58, %p59
      %p61 = scmp.ne.s32.totalorder %s50, %s53
      %p62 = scmp.eq.s32.totalorder %s19, 1
      %p63 = por %p61, %p62
      %p64 = scmp.ne.s32.totalorder %s53, %s54
      %p65 = scmp.eq.s32.totalorder %s19, 0
      %p66 = por %p64, %p65
      %p67 = scmp.ne.s32.totalorder %s53, %s54
      %p68 = scmp.eq.s32.totalorder %s20, 1
      %p69 = por %p67, %p68
      %p71 = scmp.ne.s32.totalorder %s54, %s70
      %p72 = scmp.eq.s32.totalorder %s20, 0
      %p73 = por %p71, %p72
      %s74 = ssub.s32 %s14, %s21
      %p75 = scmp.eq.s32.totalorder %s74, 0
      %s77 = sadd.s32 %s76, 1
      %s78 = scalar_select %p75, %s76, %s77
      %p81 = pneg %p75
      %p82 = scmp.eq.s32.totalorder %s14, 1
      %p83 = por %p81, %p82
      %p84 = scmp.ne.s32.totalorder %s76, %s79
      %p85 = scmp.eq.s32.totalorder %s14, 0
      %p86 = por %p84, %p85
      %p87 = scmp.ne.s32.totalorder %s76, %s79
      %p88 = scmp.eq.s32.totalorder %s19, 1
      %p89 = por %p87, %p88
      %p90 = scmp.ne.s32.totalorder %s79, %s80
      %p91 = scmp.eq.s32.totalorder %s19, 0
      %p92 = por %p90, %p91
      %p93 = scmp.ne.s32.totalorder %s79, %s80
      %p94 = scmp.eq.s32.totalorder %s20, 1
      %p95 = por %p93, %p94
      %p97 = scmp.ne.s32.totalorder %s80, %s96
      %p98 = scmp.eq.s32.totalorder %s20, 0
      %p99 = por %p97, %p98
      %s100 = ssub.s32 %s14, %s21
      %p101 = scmp.eq.s32.totalorder %s100, 0
      %s103 = sadd.s32 %s102, 1
      %s104 = scalar_select %p101, %s102, %s103
      %p107 = pneg %p101
      %p108 = scmp.eq.s32.totalorder %s14, 1
      %p109 = por %p107, %p108
      %p110 = scmp.ne.s32.totalorder %s102, %s105
      %p111 = scmp.eq.s32.totalorder %s14, 0
      %p112 = por %p110, %p111
      %p113 = scmp.ne.s32.totalorder %s102, %s105
      %p114 = scmp.eq.s32.totalorder %s19, 1
      %p115 = por %p113, %p114
      %p116 = scmp.ne.s32.totalorder %s105, %s106
      %p117 = scmp.eq.s32.totalorder %s19, 0
      %p118 = por %p116, %p117
      %p119 = scmp.ne.s32.totalorder %s105, %s106
      %p120 = scmp.eq.s32.totalorder %s20, 1
      %p121 = por %p119, %p120
      %p123 = scmp.ne.s32.totalorder %s106, %s122
      %p124 = scmp.eq.s32.totalorder %s20, 0
      %p125 = por %p123, %p124
      %s126 = ssub.s32 %s14, %s21
      %p127 = scmp.eq.s32.totalorder %s126, 0
      %s129 = sadd.s32 %s128, 1
      %s130 = scalar_select %p127, %s128, %s129
      %p133 = pneg %p127
      %p134 = scmp.eq.s32.totalorder %s14, 1
      %p135 = por %p133, %p134
      %p136 = scmp.ne.s32.totalorder %s128, %s131
      %p137 = scmp.eq.s32.totalorder %s14, 0
      %p138 = por %p136, %p137
      %p139 = scmp.ne.s32.totalorder %s128, %s131
      %p140 = scmp.eq.s32.totalorder %s19, 1
      %p141 = por %p139, %p140
      %p142 = scmp.ne.s32.totalorder %s131, %s132
      %p143 = scmp.eq.s32.totalorder %s19, 0
      %p144 = por %p142, %p143
      %p145 = scmp.ne.s32.totalorder %s131, %s132
      %p146 = scmp.eq.s32.totalorder %s20, 1
      %p147 = por %p145, %p146
      %p149 = scmp.ne.s32.totalorder %s132, %s148
      %p150 = scmp.eq.s32.totalorder %s20, 0
      %p151 = por %p149, %p150
      %p152 = scmp.le.s32.totalorder 1, %s14
      %p153 = scmp.lt.s32.totalorder %s14, 3
      %p154 = pnand %p152, %p153
      %p155 = pneg %p154
      // Predicated region
      $region9: #{tpu_custom_call.1} parent=5 // pred_check
        _
      $region10: #{tpu_custom_call.1} parent=5 // pred_check_branch
        %157 = sbr.rel (%p154) target = $region12
      $region11: #{tpu_custom_call.1} parent=5 // pred_region
        %s158 = ssub.s32 %s14, 1
      $region12: #{tpu_custom_call.1} parent=5 // pred_fallthru
        _
      %p159 = scmp.lt.s32.totalorder %s14, 2
      // Predicated region
      $region13: #{tpu_custom_call.1} parent=5 // pred_check
        %p160 = pneg %p159
      $region14: #{tpu_custom_call.1} parent=5 // pred_check_branch
        %162 = sbr.rel (%p160) target = $region16
      $region15: #{tpu_custom_call.1} parent=5 // pred_region
        // Predicated region
        $region17: #{tpu_custom_call.1} parent=15 // pred_check
          %p163 = pneg %p34
        $region18: #{tpu_custom_call.1} parent=15 // pred_check_branch
          %165 = sbr.rel (%p163) target = $region20
        $region19: #{tpu_custom_call.1} parent=15 // pred_region
          %s166 = sand.u32 %s24, 1
          %s167 = sand.u32 %s24, 1
          %s168 = smul.addr %s167, 64
          %s169 = scalar_lea.vmem [#allocation2], %s168
          %s170 = smul.u32 2, %s14
          %s171 = smul.addr %s170, 2
          %s172 = smul.addr %s171, 8
          %s173 = scalar_lea.vmem %s0, %s172
          // Predicated region
          $region21: #{tpu_custom_call.1} parent=19 // pred_check
            _
          $region22: #{tpu_custom_call.1} parent=19 // pred_check_branch
            %175 = sbr.rel (0) target = $region24
          $region23: #{tpu_custom_call.1} parent=19 // pred_region
            // Predicated region
            $region25: #{tpu_custom_call.1} parent=23 // pred_check
              _
            $region26: #{tpu_custom_call.1} parent=23 // pred_check_branch
              %177 = sbr.rel (0) target = $region28
            $region27: #{tpu_custom_call.1} parent=23 // pred_region
              loop: start=0, step=1, limit=1
              $region29: #{tpu_custom_call.1} parent=27 // loop_pre_header
                _
              $region30: #{tpu_custom_call.1} parent=27 // loop_header
                %s179 = sphi 0, %s183
                %p180 = scmp.ge.s32.totalorder %s179, 1
                %s184 = sphi %s173, %s173
                %s185 = sphi %s169, %s169
              $region31: #{tpu_custom_call.1} parent=27 // loop_header_branch
                %182 = sbr.rel (%p180) target = $region35
              $region32: #{tpu_custom_call.1} parent=27 // loop_body
                %v186 = vld [vmem:[%s184] sm:$0xff]
                %187 = vst [vmem:[%s185] sm:$0xff] %v186
                %v188 = vld [vmem:[%s184 + $0x8] sm:$0xff]
                %189 = vst [vmem:[%s185 + $0x8] sm:$0xff] %v188
                %v190 = vld [vmem:[%s184 + $0x10] sm:$0xff]
                %191 = vst [vmem:[%s185 + $0x10] sm:$0xff] %v190
                %v192 = vld [vmem:[%s184 + $0x18] sm:$0xff]
                %193 = vst [vmem:[%s185 + $0x18] sm:$0xff] %v192
                %v194 = vld [vmem:[%s184 + $0x40] sm:$0xff]
                %195 = vst [vmem:[%s185 + $0x20] sm:$0xff] %v194
                %v196 = vld [vmem:[%s184 + $0x48] sm:$0xff]
                %197 = vst [vmem:[%s185 + $0x28] sm:$0xff] %v196
                %v198 = vld [vmem:[%s184 + $0x50] sm:$0xff]
                %199 = vst [vmem:[%s185 + $0x30] sm:$0xff] %v198
                %v200 = vld [vmem:[%s184 + $0x58] sm:$0xff]
                %201 = vst [vmem:[%s185 + $0x38] sm:$0xff] %v200
              $region33: #{tpu_custom_call.1} parent=27 // loop_footer
                %s183 = sadd.s32 1, %s179
              $region34: #{tpu_custom_call.1} parent=27 // loop_footer_branch
                %178 = sbr.rel target = $region30
              $region35: #{tpu_custom_call.1} parent=27 // loop_exit
                _
            $region28: #{tpu_custom_call.1} parent=23 // pred_fallthru
              _
            // Predicated region
            $region36: #{tpu_custom_call.1} parent=23 // pred_check
              _
            $region37: #{tpu_custom_call.1} parent=23 // pred_check_branch
              %203 = sbr.rel target = $region39
            $region38: #{tpu_custom_call.1} parent=23 // pred_region
              _
            $region39: #{tpu_custom_call.1} parent=23 // pred_fallthru
              _
          $region24: #{tpu_custom_call.1} parent=19 // pred_fallthru
            _
          %204 = vnop
        $region20: #{tpu_custom_call.1} parent=15 // pred_fallthru
          _
        // Predicated region
        $region40: #{tpu_custom_call.1} parent=15 // pred_check
          %p205 = pneg %p60
        $region41: #{tpu_custom_call.1} parent=15 // pred_check_branch
          %207 = sbr.rel (%p205) target = $region43
        $region42: #{tpu_custom_call.1} parent=15 // pred_region
          %s208 = sand.u32 %s50, 1
          %s209 = sand.u32 %s50, 1
          %s210 = smul.addr %s209, 64
          %s211 = scalar_lea.vmem [#allocation3], %s210
          %s212 = smul.u32 2, %s14
          %s213 = smul.addr %s212, 8
          %s214 = scalar_lea.vmem %s1, %s213
          // Predicated region
          $region44: #{tpu_custom_call.1} parent=42 // pred_check
            _
          $region45: #{tpu_custom_call.1} parent=42 // pred_check_branch
            %216 = sbr.rel (0) target = $region47
          $region46: #{tpu_custom_call.1} parent=42 // pred_region
            // Predicated region
            $region48: #{tpu_custom_call.1} parent=46 // pred_check
              _
            $region49: #{tpu_custom_call.1} parent=46 // pred_check_branch
              %218 = sbr.rel (0) target = $region51
            $region50: #{tpu_custom_call.1} parent=46 // pred_region
              // Predicated region
              $region63: #{tpu_custom_call.1} parent=50 // pred_check
                _
              $region64: #{tpu_custom_call.1} parent=50 // pred_check_branch
                %248 = sbr.rel (0) target = $region66
              $region65: #{tpu_custom_call.1} parent=50 // pred_region
                loop: start=0, step=1, limit=1
                $region67: #{tpu_custom_call.1} parent=65 // loop_pre_header
                  _
                $region68: #{tpu_custom_call.1} parent=65 // loop_header
                  %s250 = sphi 0, %s254
                  %p251 = scmp.ge.s32.totalorder %s250, 1
                  %s255 = sphi %s214, %s214
                  %s256 = sphi %s211, %s211
                $region69: #{tpu_custom_call.1} parent=65 // loop_header_branch
                  %253 = sbr.rel (%p251) target = $region73
                $region70: #{tpu_custom_call.1} parent=65 // loop_body
                  %v257 = vld [vmem:[%s255] sm:$0xff]
                  %258 = vst [vmem:[%s256] sm:$0xff] %v257
                  %v259 = vld [vmem:[%s255 + $0x8] sm:$0xff]
                  %260 = vst [vmem:[%s256 + $0x8] sm:$0xff] %v259
                  %v261 = vld [vmem:[%s255 + $0x20] sm:$0xff]
                  %262 = vst [vmem:[%s256 + $0x10] sm:$0xff] %v261
                  %v263 = vld [vmem:[%s255 + $0x28] sm:$0xff]
                  %264 = vst [vmem:[%s256 + $0x18] sm:$0xff] %v263
                  %v265 = vld [vmem:[%s255 + $0x40] sm:$0xff]
                  %266 = vst [vmem:[%s256 + $0x20] sm:$0xff] %v265
                  %v267 = vld [vmem:[%s255 + $0x48] sm:$0xff]
                  %268 = vst [vmem:[%s256 + $0x28] sm:$0xff] %v267
                  %v269 = vld [vmem:[%s255 + $0x60] sm:$0xff]
                  %270 = vst [vmem:[%s256 + $0x30] sm:$0xff] %v269
                  %v271 = vld [vmem:[%s255 + $0x68] sm:$0xff]
                  %272 = vst [vmem:[%s256 + $0x38] sm:$0xff] %v271
                $region71: #{tpu_custom_call.1} parent=65 // loop_footer
                  %s254 = sadd.s32 1, %s250
                $region72: #{tpu_custom_call.1} parent=65 // loop_footer_branch
                  %249 = sbr.rel target = $region68
                $region73: #{tpu_custom_call.1} parent=65 // loop_exit
                  _
              $region66: #{tpu_custom_call.1} parent=50 // pred_fallthru
                _
              // Predicated region
              $region74: #{tpu_custom_call.1} parent=50 // pred_check
                _
              $region75: #{tpu_custom_call.1} parent=50 // pred_check_branch
                %274 = sbr.rel target = $region77
              $region76: #{tpu_custom_call.1} parent=50 // pred_region
                _
              $region77: #{tpu_custom_call.1} parent=50 // pred_fallthru
                _
            $region51: #{tpu_custom_call.1} parent=46 // pred_fallthru
              _
            // Predicated region
            $region52: #{tpu_custom_call.1} parent=46 // pred_check
              _
            $region53: #{tpu_custom_call.1} parent=46 // pred_check_branch
              %220 = sbr.rel target = $region55
            $region54: #{tpu_custom_call.1} parent=46 // pred_region
              %s222 = ssub.s32 256, 1
              loop: start=0, step=1, limit=1
              $region56: #{tpu_custom_call.1} parent=54 // loop_pre_header
                _
              $region57: #{tpu_custom_call.1} parent=54 // loop_header
                %s224 = sphi 0, %s228
                %p225 = scmp.ge.s32.totalorder %s224, 1
                %s229 = sphi %s214, %s214
                %s230 = sphi %s211, %s211
              $region58: #{tpu_custom_call.1} parent=54 // loop_header_branch
                %227 = sbr.rel (%p225) target = $region62
              $region59: #{tpu_custom_call.1} parent=54 // loop_body
                %v231 = vld [vmem:[%s229] sm:%s222]
                %232 = vst [vmem:[%s230] sm:%s222] %v231
                %v233 = vld [vmem:[%s229 + $0x8] sm:%s222]
                %234 = vst [vmem:[%s230 + $0x8] sm:%s222] %v233
                %v235 = vld [vmem:[%s229 + $0x20] sm:%s222]
                %236 = vst [vmem:[%s230 + $0x10] sm:%s222] %v235
                %v237 = vld [vmem:[%s229 + $0x28] sm:%s222]
                %238 = vst [vmem:[%s230 + $0x18] sm:%s222] %v237
                %v239 = vld [vmem:[%s229 + $0x40] sm:%s222]
                %240 = vst [vmem:[%s230 + $0x20] sm:%s222] %v239
                %v241 = vld [vmem:[%s229 + $0x48] sm:%s222]
                %242 = vst [vmem:[%s230 + $0x28] sm:%s222] %v241
                %v243 = vld [vmem:[%s229 + $0x60] sm:%s222]
                %244 = vst [vmem:[%s230 + $0x30] sm:%s222] %v243
                %v245 = vld [vmem:[%s229 + $0x68] sm:%s222]
                %246 = vst [vmem:[%s230 + $0x38] sm:%s222] %v245
              $region60: #{tpu_custom_call.1} parent=54 // loop_footer
                %s228 = sadd.s32 1, %s224
              $region61: #{tpu_custom_call.1} parent=54 // loop_footer_branch
                %223 = sbr.rel target = $region57
              $region62: #{tpu_custom_call.1} parent=54 // loop_exit
                _
            $region55: #{tpu_custom_call.1} parent=46 // pred_fallthru
              _
          $region47: #{tpu_custom_call.1} parent=42 // pred_fallthru
            _
          %275 = vnop
        $region43: #{tpu_custom_call.1} parent=15 // pred_fallthru
          _
      $region16: #{tpu_custom_call.1} parent=5 // pred_fallthru
        _
      %p276 = scmp.le.s32.totalorder 1, %s14
      %p277 = scmp.lt.s32.totalorder %s14, 3
      %p278 = pnand %p276, %p277
      %p279 = pneg %p278
      // Predicated region
      $region78: #{tpu_custom_call.1} parent=5 // pred_check
        _
      $region79: #{tpu_custom_call.1} parent=5 // pred_check_branch
        %281 = sbr.rel (%p278) target = $region81
      $region80: #{tpu_custom_call.1} parent=5 // pred_region
        %s282 = ssub.s32 %s14, 1
        %s283 = sand.u32 %s27, 1
        %s284 = sand.u32 %s27, 1
        %s285 = smul.addr %s284, 64
        %s286 = scalar_lea.vmem [#allocation2], %s285
        // Predicated region
        $region82: #{tpu_custom_call.1} parent=80 // pred_check
          %p287 = pneg %p40
        $region83: #{tpu_custom_call.1} parent=80 // pred_check_branch
          %289 = sbr.rel (%p287) target = $region85
        $region84: #{tpu_custom_call.1} parent=80 // pred_region
          _
        $region85: #{tpu_custom_call.1} parent=80 // pred_fallthru
          _
        %s290 = sand.u32 %s53, 1
        %s291 = sand.u32 %s53, 1
        %s292 = smul.addr %s291, 64
        %s293 = scalar_lea.vmem [#allocation3], %s292
        // Predicated region
        $region86: #{tpu_custom_call.1} parent=80 // pred_check
          %p294 = pneg %p66
        $region87: #{tpu_custom_call.1} parent=80 // pred_check_branch
          %296 = sbr.rel (%p294) target = $region89
        $region88: #{tpu_custom_call.1} parent=80 // pred_region
          _
        $region89: #{tpu_custom_call.1} parent=80 // pred_fallthru
          _
        %s297 = sand.u32 %s27, 1
        %s298 = sand.u32 %s27, 1
        %s299 = smul.addr %s298, 64
        %s300 = scalar_lea.vmem [#allocation2], %s299
        %p301 = pneg %p40
        %p302 = pneg %p37
        %s303 = sand.u32 %s53, 1
        %s304 = sand.u32 %s53, 1
        %s305 = smul.addr %s304, 64
        %s306 = scalar_lea.vmem [#allocation3], %s305
        %p307 = pneg %p66
        %p308 = pneg %p63
        %p309 = pneg %p92
        %p310 = pneg %p89
        %s311 = sand.u32 %s79, 1
        %s312 = scalar_lea.sflag [#allocation5], %s311
        %s313 = sand.u32 %s79, 1
        %s314 = smul.addr %s313, 64
        %s315 = scalar_lea.vmem [#allocation4], %s314
        %p316 = pneg %p118
        %p317 = pneg %p115
        %s318 = smul.u32 2, %s19
        %p319 = scmp.lt.s32.totalorder %s318, 3
        %s320 = scalar_select %p319, %s318, 3
        %s321 = smul.addr %s320, 8
        %s322 = scalar_lea.vmem %s3, %s321
        %p323 = pneg %p144
        %p324 = pneg %p141
        %s325 = smul.u32 2, %s19
        %p326 = scmp.lt.s32.totalorder %s325, 3
        %s327 = scalar_select %p326, %s325, 3
        %s328 = smul.addr %s327, 8
        %s329 = scalar_lea.vmem %s4, %s328
        %s330 = smul.u32 2, %s19
        %s331 = smul.u32 2, %s19
        %s332 = smul.u32 2, %s19
        %s333 = smul.u32 2, %s19
        %p334 = scmp.lt.s32.totalorder %s333, 3
        %s335 = scalar_select %p334, %s333, 3
        %s336 = smul.addr %s335, 8
        %s337 = scalar_lea.vmem %s3, %s336
        %s338 = smul.u32 2, %s19
        %s339 = smul.u32 2, %s19
        %p340 = scmp.lt.s32.totalorder %s339, 3
        %s341 = scalar_select %p340, %s339, 3
        %s342 = smul.addr %s341, 8
        %s343 = scalar_lea.vmem %s4, %s342
        %s344 = smul.u32 2, %s19
        %v345 = vld [vmem:[%s286] sm:$0xff]
        %v346 = vld [vmem:[%s286 + $0x8] sm:$0xff]
        %v347 = vld [vmem:[%s286 + $0x10] sm:$0xff]
        %v348 = vld [vmem:[%s286 + $0x18] sm:$0xff]
        %v349 = vmul.f32 %v345, %v345
        %v350 = vmul.f32 %v346, %v346
        %v351 = vmul.f32 %v347, %v347
        %v352 = vmul.f32 %v348, %v348
        %s353 = scalar_lea.vmem %s286, 32 [#allocation2]
        %v354 = vld [vmem:[%s353] sm:$0xff]
        %v355 = vld [vmem:[%s353 + $0x8] sm:$0xff]
        %v356 = vld [vmem:[%s353 + $0x10] sm:$0xff]
        %v357 = vld [vmem:[%s353 + $0x18] sm:$0xff]
        %v358 = vadd.f32 %v345, %v354
        %v359 = vadd.f32 %v346, %v355
        %v360 = vadd.f32 %v347, %v356
        %v361 = vadd.f32 %v348, %v357
        %v362 = vmul.f32 %v354, %v354
        %v363 = vmul.f32 %v355, %v355
        %v364 = vmul.f32 %v356, %v356
        %v365 = vmul.f32 %v357, %v357
        %v366 = vadd.f32 %v349, %v362
        %v367 = vadd.f32 %v350, %v363
        %v368 = vadd.f32 %v351, %v364
        %v369 = vadd.f32 %v352, %v365
        %v370 = vadd.f32 %v358, %v359
        %371 = vadd.xlane.f32.xlu0 %v370
        %v372 = vpop.xlane.xlu0 %371
        %v373 = vadd.f32 %v360, %v361
        %374 = vadd.xlane.f32.xlu0 %v373
        %v375 = vpop.xlane.xlu0 %374
        %v376 = vmul.f32 %v372, 0.001953125
        %v377 = vmul.f32 %v375, 0.001953125
        %v378 = vadd.f32 %v366, %v367
        %379 = vadd.xlane.f32.xlu0 %v378
        %v380 = vpop.xlane.xlu0 %379
        %v381 = vadd.f32 %v368, %v369
        %382 = vadd.xlane.f32.xlu0 %v381
        %v383 = vpop.xlane.xlu0 %382
        %v384 = vmul.f32 %v380, 0.001953125
        %v385 = vmul.f32 %v383, 0.001953125
        %v386 = vld [vmem:[%s293] sm:$0xff]
        %v387 = vld [vmem:[%s293 + $0x8] sm:$0xff]
        %s388 = scalar_lea.vmem %s293, 16 [#allocation3]
        %v389 = vld [vmem:[%s388] sm:$0xff]
        %v390 = vld [vmem:[%s388 + $0x8] sm:$0xff]
        %v391 = vadd.f32 %v384, 1e-05
        %v392 = vadd.f32 %v385, 1e-05
        %v393 = vmul.f32 %v376, %v376
        %v394 = vmul.f32 %v377, %v377
        %v395 = vsub.f32 %v391, %v393
        %v396 = vsub.f32 %v392, %v394
        %v397 = vrsqrt.pop %v395
        %v398 = vmul.f32 %v397, %v395
        %v399 = vmul.f32 %v398, %v397
        %v400 = vmul.f32 0.5, %v399
        %v401 = vsub.f32 1.5, %v400
        %v402 = vmul.f32 %v397, %v401
        %vm403 = vweird.f32 %v395
        %vm404 = vweird.f32 %v397
        %vm405 = vmor %vm403, %vm404
        %v406 = vsel %vm405, %v397, %v402
        %v407 = vrsqrt.pop %v396
        %v408 = vmul.f32 %v407, %v396
        %v409 = vmul.f32 %v408, %v407
        %v410 = vmul.f32 0.5, %v409
        %v411 = vsub.f32 1.5, %v410
        %v412 = vmul.f32 %v407, %v411
        %vm413 = vweird.f32 %v396
        %vm414 = vweird.f32 %v407
        %vm415 = vmor %vm413, %vm414
        %v416 = vsel %vm415, %v407, %v412
        %v417 = vmul.f32 %v386, %v406
        %v418 = vmul.f32 %v387, %v416
        %v419 = vmul.f32 %v376, %v417
        %v420 = vmul.f32 %v377, %v418
        %v421 = vsub.f32 %v389, %v419
        %v422 = vsub.f32 %v390, %v420
        %424 = vset.pattern.permute.xlu0 0
        %425 = vperm.xlu0 %424, %v417
        %v426 = vpop.permute.xlu0 %425
        %429 = vset.pattern.permute.xlu0 0
        %430 = vperm.xlu0 %429, %v418
        %v431 = vpop.permute.xlu0 %430
        %v433 = vmul.f32 %v345, %v426
        %v434 = vmul.f32 %v346, %v426
        %v435 = vmul.f32 %v347, %v431
        %v436 = vmul.f32 %v348, %v431
        %438 = vset.pattern.permute.xlu0 0
        %439 = vperm.xlu0 %438, %v421
        %v440 = vpop.permute.xlu0 %439
        %443 = vset.pattern.permute.xlu0 0
        %444 = vperm.xlu0 %443, %v422
        %v445 = vpop.permute.xlu0 %444
        %v447 = vadd.f32 %v433, %v440
        %v448 = vadd.f32 %v434, %v440
        %v449 = vadd.f32 %v435, %v445
        %v450 = vadd.f32 %v436, %v445
        %451 = vst [vmem:[%s315] sm:$0xff] %v447
        %452 = vst [vmem:[%s315 + $0x8] sm:$0xff] %v448
        %453 = vst [vmem:[%s315 + $0x10] sm:$0xff] %v449
        %454 = vst [vmem:[%s315 + $0x18] sm:$0xff] %v450
        %v455 = vld [vmem:[%s353] sm:$0xff]
        %v456 = vld [vmem:[%s353 + $0x8] sm:$0xff]
        %v457 = vld [vmem:[%s353 + $0x10] sm:$0xff]
        %v458 = vld [vmem:[%s353 + $0x18] sm:$0xff]
        %v459 = vmul.f32 %v455, %v426
        %v460 = vmul.f32 %v456, %v426
        %v461 = vmul.f32 %v457, %v431
        %v462 = vmul.f32 %v458, %v431
        %v463 = vadd.f32 %v459, %v440
        %v464 = vadd.f32 %v460, %v440
        %v465 = vadd.f32 %v461, %v445
        %v466 = vadd.f32 %v462, %v445
        %s467 = scalar_lea.vmem %s315, 32 [#allocation4]
        %468 = vst [vmem:[%s467] sm:$0xff] %v463
        %469 = vst [vmem:[%s467 + $0x8] sm:$0xff] %v464
        %470 = vst [vmem:[%s467 + $0x10] sm:$0xff] %v465
        %471 = vst [vmem:[%s467 + $0x18] sm:$0xff] %v466
        %vm472 = vcmask 7168
        %473 = vst.msk [vmem:[%s337] sm:$0xff] %vm472, %v376
        %474 = vst.msk [vmem:[%s337 + $0x8] sm:$0xff] %vm472, %v377
        %475 = vst.msk [vmem:[%s343] sm:$0xff] %vm472, %v384
        %476 = vst.msk [vmem:[%s343 + $0x8] sm:$0xff] %vm472, %v385
        %s477 = sand.u32 %s79, 1
        %s478 = scalar_lea.sflag [#allocation5], %s477
        %s479 = sand.u32 %s79, 1
        %s480 = smul.addr %s479, 64
        %s481 = scalar_lea.vmem [#allocation4], %s480
        %s482 = smul.u32 2, %s19
        %p483 = scmp.lt.s32.totalorder %s482, 3
        %s484 = scalar_select %p483, %s482, 3
        %s485 = smul.addr %s484, 8
        %s486 = scalar_lea.vmem %s3, %s485
        %s487 = smul.u32 2, %s19
        %p488 = scmp.lt.s32.totalorder %s487, 3
        %s489 = scalar_select %p488, %s487, 3
        %s490 = smul.addr %s489, 8
        %s491 = scalar_lea.vmem %s4, %s490
        // Predicated region
        $region90: #{tpu_custom_call.1} parent=80 // pred_check
          %p492 = pneg %p89
        $region91: #{tpu_custom_call.1} parent=80 // pred_check_branch
          %494 = sbr.rel (%p492) target = $region93
        $region92: #{tpu_custom_call.1} parent=80 // pred_region
          #allocation7 [shape = 'u32[6]{0}', space=smem, size = 0x18, scoped, tag = 'DMA stride descriptor']
          %s495 = smul.u32 2, %s19
          %497 = vsyncadd %s478, 0
          %s498 = smul.addr %s495, 2
          %s499 = smul.addr %s498, 8
          %s500 = scalar_lea.hbm %s2, %s499
          %s502 = sshll.u32 1, 14
          %s503 = sxor.u32 4294967295, %s502
          %s506 = sshll.u32 7, 18
          %s507 = sxor.u32 4294967295, %s506
          %s508 = sand.u32 0, %s507
          %s510 = sor.u32 %s508, 0
          %s511 = sshll.u32 %s481, 4
          %s512 = int_to_ptr.vmem [resolvable:$true] %s511
          %s513 = sshll.u32 %s500, 4
          %s514 = int_to_ptr.hbm [resolvable:$true] %s513
          %520 = sst [smem:[#allocation7]] 512
          %s521 = scalar_lea.smem [#allocation7], 1
          %522 = sst [smem:[%s521]] 1024
          %s523 = scalar_lea.smem [#allocation7], 2
          %524 = sst [smem:[%s523]] 2
          %s525 = scalar_lea.smem [#allocation7], 3
          %526 = sst [smem:[%s525]] 256
          %s527 = scalar_lea.smem [#allocation7], 4
          %528 = sst [smem:[%s527]] 256
          %s529 = scalar_lea.smem [#allocation7], 5
          %530 = sst [smem:[%s529]] 16
          %532 = dma.general %s512, 1024, %s514, %s478, [#allocation6], [#allocation7], %s510, 0
        $region93: #{tpu_custom_call.1} parent=80 // pred_fallthru
          _
        // Predicated region
        $region94: #{tpu_custom_call.1} parent=80 // pred_check
          %p533 = pneg %p115
        $region95: #{tpu_custom_call.1} parent=80 // pred_check_branch
          %535 = sbr.rel (%p533) target = $region97
        $region96: #{tpu_custom_call.1} parent=80 // pred_region
          %s536 = smul.u32 2, %s19
        $region97: #{tpu_custom_call.1} parent=80 // pred_fallthru
          _
        // Predicated region
        $region98: #{tpu_custom_call.1} parent=80 // pred_check
          %p537 = pneg %p141
        $region99: #{tpu_custom_call.1} parent=80 // pred_check_branch
          %539 = sbr.rel (%p537) target = $region101
        $region100: #{tpu_custom_call.1} parent=80 // pred_region
          %s540 = smul.u32 2, %s19
        $region101: #{tpu_custom_call.1} parent=80 // pred_fallthru
          _
      $region81: #{tpu_custom_call.1} parent=5 // pred_fallthru
        _
      %p541 = scmp.le.s32.totalorder 2, %s14
      // Predicated region
      $region102: #{tpu_custom_call.1} parent=5 // pred_check
        %p542 = pneg %p541
      $region103: #{tpu_custom_call.1} parent=5 // pred_check_branch
        %544 = sbr.rel (%p542) target = $region105
      $region104: #{tpu_custom_call.1} parent=5 // pred_region
        %s545 = ssub.s32 %s14, 2
        // Predicated region
        $region106: #{tpu_custom_call.1} parent=104 // pred_check
          %p546 = pneg %p95
        $region107: #{tpu_custom_call.1} parent=104 // pred_check_branch
          %548 = sbr.rel (%p546) target = $region109
        $region108: #{tpu_custom_call.1} parent=104 // pred_region
          %s549 = sand.u32 %s80, 1
          %s550 = scalar_lea.sflag [#allocation5], %s549
          %s551 = sand.u32 %s80, 1
          %s552 = smul.addr %s551, 64
          %s553 = scalar_lea.vmem [#allocation4], %s552
          %555 = dma.done %s550, 1024
        $region109: #{tpu_custom_call.1} parent=104 // pred_fallthru
          _
        // Predicated region
        $region110: #{tpu_custom_call.1} parent=104 // pred_check
          %p556 = pneg %p121
        $region111: #{tpu_custom_call.1} parent=104 // pred_check_branch
          %558 = sbr.rel (%p556) target = $region113
        $region112: #{tpu_custom_call.1} parent=104 // pred_region
          %s559 = smul.u32 2, %s20
          %p560 = scmp.lt.s32.totalorder %s559, 3
          %s561 = scalar_select %p560, %s559, 3
          %s562 = smul.addr %s561, 8
          %s563 = scalar_lea.vmem %s3, %s562
        $region113: #{tpu_custom_call.1} parent=104 // pred_fallthru
          _
        // Predicated region
        $region114: #{tpu_custom_call.1} parent=104 // pred_check
          %p564 = pneg %p147
        $region115: #{tpu_custom_call.1} parent=104 // pred_check_branch
          %566 = sbr.rel (%p564) target = $region117
        $region116: #{tpu_custom_call.1} parent=104 // pred_region
          %s567 = smul.u32 2, %s20
          %p568 = scmp.lt.s32.totalorder %s567, 3
          %s569 = scalar_select %p568, %s567, 3
          %s570 = smul.addr %s569, 8
          %s571 = scalar_lea.vmem %s4, %s570
        $region117: #{tpu_custom_call.1} parent=104 // pred_fallthru
          _
      $region105: #{tpu_custom_call.1} parent=5 // pred_fallthru
        _
    $region6: #{tpu_custom_call.1} parent=1 // loop_footer
      %s18 = sadd.s32 1, %s14
    $region7: #{tpu_custom_call.1} parent=1 // loop_footer_branch
      %13 = sbr.rel target = $region3
    $region8: #{tpu_custom_call.1} parent=1 // loop_exit
      _
    %572 = vsyncpa [#allocation5], 1
    %s573 = scalar_lea.sflag [#allocation5], 1
    %574 = vsyncpa %s573, 1

</llo_original>
